<compile_context>
chip_gen: v5e
topology: v5e:2x2
jax: 0.10.0
libtpu: 0.0.40
codegen_flags: <defaults>
</compile_context>

<pallas_src>
import jax
import jax.numpy as jnp
from jax.experimental import pallas as pl
from jax.experimental.pallas import tpu as pltpu


def _head_kernel(emb_ref, mask_ref, w_ref, b_ref, out_ref, sum_acc, cnt_acc):
    # emb_ref : [1, TN, D]   (one graph, TN nodes of this chunk, D features on lanes)
    # mask_ref: [1, 1, TN]   (mask chunk, TN on lanes)
    # w_ref   : [D, O_pad]   (resident across all grid steps)
    # b_ref   : [1, O_pad]
    # out_ref : [1, 1, O_pad]
    # sum_acc : [1, D] f32 scratch, cnt_acc : [1, 1] f32 scratch
    n = pl.program_id(1)

    @pl.when(n == 0)
    def _init():
        sum_acc[...] = jnp.zeros_like(sum_acc)
        cnt_acc[...] = jnp.zeros_like(cnt_acc)

    emb = emb_ref[0].astype(jnp.float32)    # [TN, D]  (per-block upcast if input is bf16)
    mask = mask_ref[0]                      # [1, TN]  (f32)

    # Masked partial sum over this node chunk on the MXU: [1,TN] @ [TN,D] -> [1,D].
    sum_acc[...] += jnp.dot(mask, emb, preferred_element_type=jnp.float32)
    # Node count for this chunk: lane reduce -> [1,1].
    cnt_acc[...] += jnp.sum(mask, axis=1, keepdims=True)

    @pl.when(n == pl.num_programs(1) - 1)
    def _finish():
        # Runs once per graph. approx=False keeps the exact divide (an all-padding
        # graph still yields nan, matching torch's sum/0 behaviour).
        inv_cnt = pl.reciprocal(cnt_acc[...], approx=False)          # [1, 1]
        read_out = sum_acc[...] * inv_cnt                            # [1, D]
        out = jnp.dot(read_out, w_ref[...].astype(jnp.float32),
                      preferred_element_type=jnp.float32)            # [1, O_pad]
        out_ref[0] = (out + b_ref[...].astype(jnp.float32)).astype(out_ref.dtype)


def _choose_node_tile(N, D, itemsize, target_bytes):
    """Node-axis tile TN.

    Constraints: TN == N, or (TN % 128 == 0 and N % TN == 0) so the [1,TN,D]
    embedding block (TN on sublanes) and the [1,1,TN] mask block (TN on lanes)
    both satisfy TPU tiling rules and no ragged tail block exists.
    `target_bytes` is the per-buffer budget for one streamed embedding block;
    with double-buffering this stays well inside every generation's scoped VMEM.
    """
    if N * D * itemsize <= target_bytes:
        return N
    cap = max(128, (target_bytes // (D * itemsize)) // 128 * 128)
    start = min(cap, (N // 128) * 128)
    for cand in range(start, 0, -128):
        if N % cand == 0:
            return cand
    return N  # no 128-aligned divisor of N: fall back to the full row


def linear_predict_head(embedding, node_mask, weight, bias, *,
                        node_tile=None, block_bytes=2 << 20):
    """embedding: [B, N, D], node_mask: [B, N], weight: [O, D] (torch layout), bias: [O]."""
    B, N, D = embedding.shape
    O = weight.shape[0]

    if node_tile is None:
        node_tile = _choose_node_tile(N, D, jnp.dtype(embedding.dtype).itemsize,
                                      block_bytes)
    tn = int(node_tile)
    assert tn == N or (N % tn == 0 and tn % 128 == 0), "bad node tile"

    # Lane-dense output: pad O up to a multiple of 128 (weight/bias padded, result sliced).
    o_pad = max(128, ((O + 127) // 128) * 128)
    w_pad = jnp.zeros((D, o_pad), jnp.float32).at[:, :O].set(
        weight.T.astype(jnp.float32))
    b_pad = jnp.zeros((1, o_pad), jnp.float32).at[:, :O].set(bias.astype(jnp.float32))

    # Mask as [B, 1, N]: N stays on the lane axis (only 8x sublane padding, not 128x lane).
    mask3 = node_mask.reshape(B, 1, N).astype(jnp.float32)

    grid = (B, N // tn)
    out3 = pl.pallas_call(
        _head_kernel,
        out_shape=jax.ShapeDtypeStruct((B, 1, o_pad), jnp.float32),
        grid_spec=pltpu.PrefetchScalarGridSpec(
            num_scalar_prefetch=0,
            grid=grid,
            in_specs=[
                pl.BlockSpec((1, tn, D), lambda b, n: (b, n, 0)),     # streamed embedding
                pl.BlockSpec((1, 1, tn), lambda b, n: (b, 0, n)),     # streamed mask chunk
                pl.BlockSpec((D, o_pad), lambda b, n: (0, 0)),        # resident weight
                pl.BlockSpec((1, o_pad), lambda b, n: (0, 0)),        # resident bias
            ],
            out_specs=pl.BlockSpec((1, 1, o_pad), lambda b, n: (b, 0, 0)),
            scratch_shapes=[
                pltpu.VMEM((1, D), jnp.float32),   # masked-sum accumulator
                pltpu.VMEM((1, 1), jnp.float32),   # node-count accumulator
            ],
        ),
        compiler_params=pltpu.CompilerParams(
            dimension_semantics=("parallel", "arbitrary"),
        ),
    )(embedding, mask3, w_pad, b_pad)

    return out3[:, 0, :O]


if __name__ == "__main__":
    key = jax.random.PRNGKey(0)

    def reference(embedding, node_mask, weight, bias):
        pooled = (embedding * node_mask[:, :, None]).sum(1) / node_mask.sum(1, keepdims=True)
        return pooled @ weight.T + bias

    def run_case(k, B, N, D, O, node_tile=None):
        k_emb, k_w, k_b, k_m = jax.random.split(k, 4)
        embedding = jax.random.normal(k_emb, (B, N, D), dtype=jnp.float32)
        node_mask = (jax.random.uniform(k_m, (B, N)) > 0.3).astype(jnp.float32)
        node_mask = node_mask.at[:, 0].set(1.0)   # at least one valid node per graph
        bound = 1.0 / jnp.sqrt(D)
        weight = jax.random.uniform(k_w, (O, D), minval=-bound, maxval=bound,
                                    dtype=jnp.float32)
        bias = jax.random.uniform(k_b, (O,), minval=-bound, maxval=bound,
                                  dtype=jnp.float32)

        out = linear_predict_head(embedding, node_mask, weight, bias,
                                  node_tile=node_tile)
        out = jax.block_until_ready(out)
        ref = reference(embedding, node_mask, weight, bias)
        assert out.shape == (B, O)
        # MXU f32 pooling may differ from the VPU-summed reference at the ~1e-6..1e-5 level.
        assert jnp.allclose(out, ref, atol=1e-4, rtol=1e-4), "mismatch vs reference"

    k1, k2 = jax.random.split(key)
    # Small shapes matching the module: batch=2, nodes(seq)=8, hidden=32, output=4.
    run_case(k1, B=2, N=8, D=32, O=4)
    # Exercise the streamed node-axis accumulation (multiple "arbitrary" grid steps).
    run_case(k2, B=3, N=256, D=32, O=4, node_tile=128)

    print("KERNEL_OK")
</pallas_src>

<mosaic_0001>
module attributes {stable_mosaic.version = 11 : i64} {
  func.func @_head_kernel(%arg0: i32, %arg1: i32, %arg2: memref<1x8x32xf32, #tpu.memory_space<vmem>>, %arg3: memref<1x1x8xf32, #tpu.memory_space<vmem>>, %arg4: memref<32x128xf32, #tpu.memory_space<vmem>>, %arg5: memref<1x128xf32, #tpu.memory_space<vmem>>, %arg6: memref<1x1x128xf32, #tpu.memory_space<vmem>>, %arg7: memref<1x32xf32, #tpu.memory_space<vmem>>, %arg8: memref<1x1xf32, #tpu.memory_space<vmem>>) attributes {dimension_semantics = [#tpu.dimension_semantics<parallel>, #tpu.dimension_semantics<arbitrary>], iteration_bounds = array<i64: 2, 1>, scalar_prefetch = 0 : i64, scratch_operands = 2 : i64, tpu.core_type = #tpu.core_type<tc>, window_params = [{transform_indices = @transform_0, window_bounds = array<i64: 1, 8, 32>}, {transform_indices = @transform_1, window_bounds = array<i64: 1, 1, 8>}, {pipeline_mode = #tpu.pipeline_mode<synchronous>, transform_indices = @transform_2, window_bounds = array<i64: 32, 128>}, {pipeline_mode = #tpu.pipeline_mode<synchronous>, transform_indices = @transform_3, window_bounds = array<i64: 1, 128>}, {transform_indices = @transform_4, window_bounds = array<i64: 1, 1, 128>}]} {
    %c0_i32 = arith.constant 0 : i32
    %0 = arith.cmpi eq, %arg1, %c0_i32 : i32
    %1 = arith.extui %0 : i1 to i32
    %c0_i32_0 = arith.constant 0 : i32
    %2 = arith.cmpi ne, %1, %c0_i32_0 : i32
    scf.if %2 {
      %cst_17 = arith.constant 0.000000e+00 : f32
      %19 = vector.broadcast %cst_17 : f32 to vector<1x32xf32>
      %c0_18 = arith.constant 0 : index
      %c0_19 = arith.constant 0 : index
      %20 = vector.load %arg7[%c0_18, %c0_19] : memref<1x32xf32, #tpu.memory_space<vmem>>, vector<1x32xf32>
      tpu.vector_store %arg7[%c0_18, %c0_19], %19 {strides = array<i32>} : memref<1x32xf32, #tpu.memory_space<vmem>>, vector<1x32xf32>,
      %cst_20 = arith.constant 0.000000e+00 : f32
      %21 = vector.broadcast %cst_20 : f32 to vector<1x1xf32>
      %c0_21 = arith.constant 0 : index
      %c0_22 = arith.constant 0 : index
      %22 = vector.load %arg8[%c0_21, %c0_22] : memref<1x1xf32, #tpu.memory_space<vmem>>, vector<1x1xf32>
      tpu.vector_store %arg8[%c0_21, %c0_22], %21 {strides = array<i32>} : memref<1x1xf32, #tpu.memory_space<vmem>>, vector<1x1xf32>,
    } else {
    }
    %c0 = arith.constant 0 : index
    %c0_1 = arith.constant 0 : index
    %c0_2 = arith.constant 0 : index
    %3 = vector.load %arg2[%c0, %c0_1, %c0_2] : memref<1x8x32xf32, #tpu.memory_space<vmem>>, vector<1x8x32xf32>
    %4 = vector.shape_cast %3 : vector<1x8x32xf32> to vector<8x32xf32>
    %c0_3 = arith.constant 0 : index
    %c0_4 = arith.constant 0 : index
    %c0_5 = arith.constant 0 : index
    %5 = vector.load %arg3[%c0_3, %c0_4, %c0_5] : memref<1x1x8xf32, #tpu.memory_space<vmem>>, vector<1x1x8xf32>
    %6 = vector.shape_cast %5 : vector<1x1x8xf32> to vector<1x8xf32>
    %c0_6 = arith.constant 0 : index
    %c0_7 = arith.constant 0 : index
    %7 = vector.load %arg7[%c0_6, %c0_7] : memref<1x32xf32, #tpu.memory_space<vmem>>, vector<1x32xf32>
    %cst = arith.constant dense<0.000000e+00> : vector<1x32xf32>
    %8 = tpu.matmul %6, %4, %cst {dimension_numbers = #tpu.dot_dimension_numbers<[1], [0], [0], [1], [0, 0, 1, 1], [], []>} : vector<1x8xf32>, vector<8x32xf32>, vector<1x32xf32> -> vector<1x32xf32>
    %9 = arith.addf %7, %8 : vector<1x32xf32>
    %c0_8 = arith.constant 0 : index
    %c0_9 = arith.constant 0 : index
    %10 = vector.load %arg7[%c0_8, %c0_9] : memref<1x32xf32, #tpu.memory_space<vmem>>, vector<1x32xf32>
    tpu.vector_store %arg7[%c0_8, %c0_9], %9 {strides = array<i32>} : memref<1x32xf32, #tpu.memory_space<vmem>>, vector<1x32xf32>,
    %c0_10 = arith.constant 0 : index
    %c0_11 = arith.constant 0 : index
    %11 = vector.load %arg8[%c0_10, %c0_11] : memref<1x1xf32, #tpu.memory_space<vmem>>, vector<1x1xf32>
    %cst_12 = arith.constant dense<0.000000e+00> : vector<1xf32>
    %12 = vector.multi_reduction <add>, %6, %cst_12 [1] : vector<1x8xf32> to vector<1xf32>
    %13 = vector.shape_cast %12 : vector<1xf32> to vector<1x1xf32>
    %14 = arith.addf %11, %13 : vector<1x1xf32>
    %c0_13 = arith.constant 0 : index
    %c0_14 = arith.constant 0 : index
    %15 = vector.load %arg8[%c0_13, %c0_14] : memref<1x1xf32, #tpu.memory_space<vmem>>, vector<1x1xf32>
    tpu.vector_store %arg8[%c0_13, %c0_14], %14 {strides = array<i32>} : memref<1x1xf32, #tpu.memory_space<vmem>>, vector<1x1xf32>,
    %c0_i32_15 = arith.constant 0 : i32
    %16 = arith.cmpi eq, %arg1, %c0_i32_15 : i32
    %17 = arith.extui %16 : i1 to i32
    %c0_i32_16 = arith.constant 0 : i32
    %18 = arith.cmpi ne, %17, %c0_i32_16 : i32
    scf.if %18 {
      %c0_17 = arith.constant 0 : index
      %c0_18 = arith.constant 0 : index
      %19 = vector.load %arg8[%c0_17, %c0_18] : memref<1x1xf32, #tpu.memory_space<vmem>>, vector<1x1xf32>
      %20 = tpu.reciprocal %19 : vector<1x1xf32> -> vector<1x1xf32>
      %c0_19 = arith.constant 0 : index
      %c0_20 = arith.constant 0 : index
      %21 = vector.load %arg7[%c0_19, %c0_20] : memref<1x32xf32, #tpu.memory_space<vmem>>, vector<1x32xf32>
      %22 = vector.broadcast %20 : vector<1x1xf32> to vector<1x32xf32>
      %23 = arith.mulf %21, %22 : vector<1x32xf32>
      %c0_21 = arith.constant 0 : index
      %c0_22 = arith.constant 0 : index
      %24 = vector.load %arg4[%c0_21, %c0_22] : memref<32x128xf32, #tpu.memory_space<vmem>>, vector<32x128xf32>
      %cst_23 = arith.constant dense<0.000000e+00> : vector<1x128xf32>
      %25 = tpu.matmul %23, %24, %cst_23 {dimension_numbers = #tpu.dot_dimension_numbers<[1], [0], [0], [1], [0, 0, 1, 1], [], []>} : vector<1x32xf32>, vector<32x128xf32>, vector<1x128xf32> -> vector<1x128xf32>
      %c0_24 = arith.constant 0 : index
      %c0_25 = arith.constant 0 : index
      %26 = vector.load %arg5[%c0_24, %c0_25] : memref<1x128xf32, #tpu.memory_space<vmem>>, vector<1x128xf32>
      %27 = arith.addf %25, %26 : vector<1x128xf32>
      %c0_26 = arith.constant 0 : index
      %c0_27 = arith.constant 0 : index
      %c0_28 = arith.constant 0 : index
      %28 = vector.load %arg6[%c0_26, %c0_27, %c0_28] : memref<1x1x128xf32, #tpu.memory_space<vmem>>, vector<1x1x128xf32>
      %29 = vector.shape_cast %28 : vector<1x1x128xf32> to vector<1x128xf32>
      %30 = vector.shape_cast %27 : vector<1x128xf32> to vector<1x1x128xf32>
      tpu.vector_store %arg6[%c0_26, %c0_27, %c0_28], %30 {strides = array<i32>} : memref<1x1x128xf32, #tpu.memory_space<vmem>>, vector<1x1x128xf32>,
    } else {
    }
    return
  }
  func.func @transform_0(%arg0: i32, %arg1: i32) -> (i32, i32, i32) {
    %c0_i32 = arith.constant 0 : i32
    %c0_i32_0 = arith.constant 0 : i32
    return %arg0, %arg1, %c0_i32 : i32, i32, i32
  }
  func.func @transform_1(%arg0: i32, %arg1: i32) -> (i32, i32, i32) {
    %c0_i32 = arith.constant 0 : i32
    %c0_i32_0 = arith.constant 0 : i32
    return %arg0, %c0_i32, %arg1 : i32, i32, i32
  }
  func.func @transform_2(%arg0: i32, %arg1: i32) -> (i32, i32) {
    %c0_i32 = arith.constant 0 : i32
    %c0_i32_0 = arith.constant 0 : i32
    %c0_i32_1 = arith.constant 0 : i32
    return %c0_i32, %c0_i32_0 : i32, i32
  }
  func.func @transform_3(%arg0: i32, %arg1: i32) -> (i32, i32) {
    %c0_i32 = arith.constant 0 : i32
    %c0_i32_0 = arith.constant 0 : i32
    %c0_i32_1 = arith.constant 0 : i32
    return %c0_i32, %c0_i32_0 : i32, i32
  }
  func.func @transform_4(%arg0: i32, %arg1: i32) -> (i32, i32, i32) {
    %c0_i32 = arith.constant 0 : i32
    %c0_i32_0 = arith.constant 0 : i32
    %c0_i32_1 = arith.constant 0 : i32
    return %arg0, %c0_i32, %c0_i32_0 : i32, i32, i32
  }
}

</mosaic_0001>

<llo_original>
// kernel: tpu_custom_call.1
$region0: #{tpu_custom_call.1}
  #allocation0 [shape = 'u32[]', space=smem, size = 0x4, offset = 0x4, fixed_abs, tag = 'smem constant byte address 0x4 - core index']
  #allocation1 [shape = 'u32[72,128]{1,0:T(1,128)}', space=vmem, size = 0x9000, scoped, tag = 'internal scratch']
  #allocation2 [shape = 'f32[1,32]{1,0:T(1,128)}', space=vmem, size = 0x200, scoped, tag = 'scratch operand']
  #allocation3 [shape = 'f32[1,1]{1,0:T(1,128)}', space=vmem, size = 0x200, scoped, tag = 'scratch operand']
  %s0 = inlined_call_operand.hbm [shape: f32[2,8,32], index: 0, kind: input, shape index: {}]
  %s1 = inlined_call_operand.hbm [shape: f32[2,1,8], index: 1, kind: input, shape index: {}]
  %s2 = inlined_call_operand.hbm [shape: f32[32,128], index: 2, kind: input, shape index: {}]
  %s3 = inlined_call_operand.vmem [shape: f32[1,128], index: 3, kind: input, shape index: {}]
  %s4 = inlined_call_operand.hbm [shape: f32[2,1,128], index: 4, kind: output, shape index: {}]
  %s5 = sld [smem:[#allocation0]]
  $region69: #{tpu_custom_call.1} parent=0
    _
  %s7 = ssub.s32 1, %s5
  %s8 = scalar_select 0, %s7, %s5
  $region1: #{tpu_custom_call.1} parent=0
    #allocation4 [shape = 'u8[8192]{0}', space=vmem, size = 0x2000, scoped, tag = 'input window, operand 0']
    #allocation5 [shape = 's32[2]{0}', space=sflag, size = 0x8, scoped, tag = 'scoped memory for tpu_custom_call.1']
    #allocation6 [shape = 's32[2]{0}', space=sflag, size = 0x8, scoped, tag = 'scoped memory for tpu_custom_call.1']
    #allocation7 [shape = 'u8[1024]{0}', space=vmem, size = 0x400, scoped, tag = 'input window, operand 1']
    #allocation8 [shape = 's32[2]{0}', space=sflag, size = 0x8, scoped, tag = 'scoped memory for tpu_custom_call.1']
    #allocation9 [shape = 'u8[16384]{0}', space=vmem, size = 0x4000, scoped, tag = 'input window, operand 2, single buffered']
    #allocation10 [shape = 'u8[1024]{0}', space=vmem, size = 0x400, scoped, tag = 'output window, operand 0']
    %9 = vsyncpa [#allocation5], 0
    %s10 = scalar_lea.sflag [#allocation5], 1
    %11 = vsyncpa %s10, 0
    %12 = vsyncpa [#allocation8], 0
    %s13 = scalar_lea.sflag [#allocation8], 1
    %14 = vsyncpa %s13, 0
    %15 = vsyncpa [#allocation6], 0
    %s16 = scalar_lea.sflag [#allocation6], 1
    %17 = vsyncpa %s16, 0
    loop: start=0, step=1, limit=4
    $region2: #{tpu_custom_call.1} parent=1 // loop_pre_header
      _
    $region3: #{tpu_custom_call.1} parent=1 // loop_header
      %s19 = sphi 0, %s23
      %p20 = scmp.ge.s32.totalorder %s19, 4
      %s26 = sphi 0, %s38
      %s27 = sphi 0, %s34
      %s28 = sphi 0, %s26
      %s29 = sphi 0, %s27
      %s30 = sphi 0, %s28
      %s31 = sphi 0, %s29
      %s43 = sphi 0, %s45
      %s46 = sphi 0, %s43
      %s47 = sphi 0, %s46
      %s63 = sphi 0, %s47
      %s71 = sphi 0, %s73
      %s74 = sphi 0, %s71
      %s75 = sphi 0, %s74
      %s91 = sphi 0, %s75
      %s95 = sphi 0, %s95
      %s97 = sphi 0, %s95
      %s98 = sphi 0, %s97
      %s112 = sphi 0, %s98
      %s116 = sphi 0, %s116
      %s118 = sphi 0, %s116
      %s119 = sphi 0, %s118
      %s133 = sphi 0, %s119
      %s139 = sphi 0, %s141
      %s142 = sphi 0, %s139
      %s143 = sphi 0, %s142
      %s159 = sphi 0, %s143
    $region4: #{tpu_custom_call.1} parent=1 // loop_header_branch
      %22 = sbr.rel (%p20) target = $region8
    $region5: #{tpu_custom_call.1} parent=1 // loop_body
      %s24 = ssub.s32 %s19, 1
      %s25 = ssub.s32 %s19, 2
      %s32 = sadd.s32 1, %s27
      %p33 = scmp.ge.s32.totalorder %s32, 1
      %s34 = scalar_select %p33, 0, %s32
      %s35 = sadd.s32 1, %s26
      %s36 = scalar_select %p33, %s35, %s26
      %p37 = scmp.ge.s32.totalorder %s36, 2
      %s38 = scalar_select %p37, 0, %s36
      %s39 = ssub.s32 %s26, %s38
      %s40 = ssub.s32 %s27, %s34
      %s41 = sor.u32 %s39, %s40
      %p42 = scmp.eq.s32.totalorder %s41, 0
      %s44 = sadd.s32 %s43, 1
      %s45 = scalar_select %p42, %s43, %s44
      %p48 = pneg %p42
      %p49 = scmp.eq.s32.totalorder %s19, 1
      %p50 = por %p48, %p49
      %p51 = scmp.ne.s32.totalorder %s43, %s46
      %p52 = scmp.eq.s32.totalorder %s19, 0
      %p53 = por %p51, %p52
      %p54 = scmp.ne.s32.totalorder %s43, %s46
      %p55 = scmp.eq.s32.totalorder %s24, 1
      %p56 = por %p54, %p55
      %p57 = scmp.ne.s32.totalorder %s46, %s47
      %p58 = scmp.eq.s32.totalorder %s24, 0
      %p59 = por %p57, %p58
      %p60 = scmp.ne.s32.totalorder %s46, %s47
      %p61 = scmp.eq.s32.totalorder %s25, 1
      %p62 = por %p60, %p61
      %p64 = scmp.ne.s32.totalorder %s47, %s63
      %p65 = scmp.eq.s32.totalorder %s25, 0
      %p66 = por %p64, %p65
      %s67 = ssub.s32 %s26, %s38
      %s68 = ssub.s32 %s27, %s34
      %s69 = sor.u32 %s67, %s68
      %p70 = scmp.eq.s32.totalorder %s69, 0
      %s72 = sadd.s32 %s71, 1
      %s73 = scalar_select %p70, %s71, %s72
      %p76 = pneg %p70
      %p77 = scmp.eq.s32.totalorder %s19, 1
      %p78 = por %p76, %p77
      %p79 = scmp.ne.s32.totalorder %s71, %s74
      %p80 = scmp.eq.s32.totalorder %s19, 0
      %p81 = por %p79, %p80
      %p82 = scmp.ne.s32.totalorder %s71, %s74
      %p83 = scmp.eq.s32.totalorder %s24, 1
      %p84 = por %p82, %p83
      %p85 = scmp.ne.s32.totalorder %s74, %s75
      %p86 = scmp.eq.s32.totalorder %s24, 0
      %p87 = por %p85, %p86
      %p88 = scmp.ne.s32.totalorder %s74, %s75
      %p89 = scmp.eq.s32.totalorder %s25, 1
      %p90 = por %p88, %p89
      %p92 = scmp.ne.s32.totalorder %s75, %s91
      %p93 = scmp.eq.s32.totalorder %s25, 0
      %p94 = por %p92, %p93
      %s96 = sadd.s32 %s95, 1
      %p99 = scmp.eq.s32.totalorder %s19, 1
      %p100 = scmp.ne.s32.totalorder %s95, %s97
      %p101 = scmp.eq.s32.totalorder %s19, 0
      %p102 = por %p100, %p101
      %p103 = scmp.ne.s32.totalorder %s95, %s97
      %p104 = scmp.eq.s32.totalorder %s24, 1
      %p105 = por %p103, %p104
      %p106 = scmp.ne.s32.totalorder %s97, %s98
      %p107 = scmp.eq.s32.totalorder %s24, 0
      %p108 = por %p106, %p107
      %p109 = scmp.ne.s32.totalorder %s97, %s98
      %p110 = scmp.eq.s32.totalorder %s25, 1
      %p111 = por %p109, %p110
      %p113 = scmp.ne.s32.totalorder %s98, %s112
      %p114 = scmp.eq.s32.totalorder %s25, 0
      %p115 = por %p113, %p114
      %s117 = sadd.s32 %s116, 1
      %p120 = scmp.eq.s32.totalorder %s19, 1
      %p121 = scmp.ne.s32.totalorder %s116, %s118
      %p122 = scmp.eq.s32.totalorder %s19, 0
      %p123 = por %p121, %p122
      %p124 = scmp.ne.s32.totalorder %s116, %s118
      %p125 = scmp.eq.s32.totalorder %s24, 1
      %p126 = por %p124, %p125
      %p127 = scmp.ne.s32.totalorder %s118, %s119
      %p128 = scmp.eq.s32.totalorder %s24, 0
      %p129 = por %p127, %p128
      %p130 = scmp.ne.s32.totalorder %s118, %s119
      %p131 = scmp.eq.s32.totalorder %s25, 1
      %p132 = por %p130, %p131
      %p134 = scmp.ne.s32.totalorder %s119, %s133
      %p135 = scmp.eq.s32.totalorder %s25, 0
      %p136 = por %p134, %p135
      %s137 = ssub.s32 %s26, %s38
      %p138 = scmp.eq.s32.totalorder %s137, 0
      %s140 = sadd.s32 %s139, 1
      %s141 = scalar_select %p138, %s139, %s140
      %p144 = pneg %p138
      %p145 = scmp.eq.s32.totalorder %s19, 1
      %p146 = por %p144, %p145
      %p147 = scmp.ne.s32.totalorder %s139, %s142
      %p148 = scmp.eq.s32.totalorder %s19, 0
      %p149 = por %p147, %p148
      %p150 = scmp.ne.s32.totalorder %s139, %s142
      %p151 = scmp.eq.s32.totalorder %s24, 1
      %p152 = por %p150, %p151
      %p153 = scmp.ne.s32.totalorder %s142, %s143
      %p154 = scmp.eq.s32.totalorder %s24, 0
      %p155 = por %p153, %p154
      %p156 = scmp.ne.s32.totalorder %s142, %s143
      %p157 = scmp.eq.s32.totalorder %s25, 1
      %p158 = por %p156, %p157
      %p160 = scmp.ne.s32.totalorder %s143, %s159
      %p161 = scmp.eq.s32.totalorder %s25, 0
      %p162 = por %p160, %p161
      %p163 = scmp.le.s32.totalorder 1, %s19
      %p164 = scmp.lt.s32.totalorder %s19, 3
      %p165 = pnand %p163, %p164
      %p166 = pneg %p165
      // Predicated region
      $region9: #{tpu_custom_call.1} parent=5 // pred_check
        _
      $region10: #{tpu_custom_call.1} parent=5 // pred_check_branch
        %168 = sbr.rel (%p165) target = $region12
      $region11: #{tpu_custom_call.1} parent=5 // pred_region
        %s169 = ssub.s32 %s19, 1
        // Predicated region
        $region13: #{tpu_custom_call.1} parent=11 // pred_check
          %p170 = pneg %p108
        $region14: #{tpu_custom_call.1} parent=11 // pred_check_branch
          %172 = sbr.rel (%p170) target = $region16
        $region15: #{tpu_custom_call.1} parent=11 // pred_region
          %174 = vsyncadd [#allocation8], 0
          %s175 = sshll.u32 %s2, 4
          %s176 = int_to_ptr.hbm [resolvable:$true] %s175
          %s177 = sshll.u32 [#allocation9], 4
          %s178 = int_to_ptr.vmem [resolvable:$true] %s177
          %183 = dma.hbm_to_vmem [thread:$0]  %s176, 512, %s178, [#allocation8], 128, 128, 8
        $region16: #{tpu_custom_call.1} parent=11 // pred_fallthru
          _
        // Predicated region
        $region17: #{tpu_custom_call.1} parent=11 // pred_check
          %p184 = pneg %p129
        $region18: #{tpu_custom_call.1} parent=11 // pred_check_branch
          %186 = sbr.rel (%p184) target = $region20
        $region19: #{tpu_custom_call.1} parent=11 // pred_region
          _
        $region20: #{tpu_custom_call.1} parent=11 // pred_fallthru
          _
      $region12: #{tpu_custom_call.1} parent=5 // pred_fallthru
        _
      %p187 = scmp.lt.s32.totalorder %s19, 2
      // Predicated region
      $region21: #{tpu_custom_call.1} parent=5 // pred_check
        %p188 = pneg %p187
      $region22: #{tpu_custom_call.1} parent=5 // pred_check_branch
        %190 = sbr.rel (%p188) target = $region24
      $region23: #{tpu_custom_call.1} parent=5 // pred_region
        // Predicated region
        $region25: #{tpu_custom_call.1} parent=23 // pred_check
          %p191 = pneg %p53
        $region26: #{tpu_custom_call.1} parent=23 // pred_check_branch
          %193 = sbr.rel (%p191) target = $region28
        $region27: #{tpu_custom_call.1} parent=23 // pred_region
          %s194 = sand.u32 %s43, 1
          %s195 = scalar_lea.sflag [#allocation5], %s194
          %s196 = sand.u32 %s43, 1
          %s197 = smul.addr %s196, 8
          %s198 = scalar_lea.vmem [#allocation4], %s197
          %200 = vsyncadd %s195, 0
          %s201 = sadd.s32 %s27, %s26
          %s202 = smul.addr %s201, 8
          %s203 = scalar_lea.hbm %s0, %s202
          %s205 = sshll.u32 %s203, 4
          %s206 = int_to_ptr.hbm [resolvable:$true] %s205
          %s207 = sshll.u32 %s198, 4
          %s208 = int_to_ptr.vmem [resolvable:$true] %s207
          %210 = dma.hbm_to_vmem [thread:$0]  %s206, 128, %s208, %s195
        $region28: #{tpu_custom_call.1} parent=23 // pred_fallthru
          _
        // Predicated region
        $region29: #{tpu_custom_call.1} parent=23 // pred_check
          %p211 = pneg %p81
        $region30: #{tpu_custom_call.1} parent=23 // pred_check_branch
          %213 = sbr.rel (%p211) target = $region32
        $region31: #{tpu_custom_call.1} parent=23 // pred_region
          %s214 = sand.u32 %s19, 1
          %s215 = scalar_lea.sflag [#allocation8], %s214
          %s216 = sand.u32 %s71, 1
          %s217 = scalar_lea.vmem [#allocation7], %s216
          %219 = vsyncadd %s215, 0
          %s220 = sadd.s32 %s27, %s26
          %s221 = scalar_lea.hbm %s1, %s220
          %s223 = sshll.u32 %s221, 4
          %s224 = int_to_ptr.hbm [resolvable:$true] %s223
          %s225 = sshll.u32 %s217, 4
          %s226 = int_to_ptr.vmem [resolvable:$true] %s225
          %228 = dma.hbm_to_vmem [thread:$0]  %s224, 16, %s226, %s215
        $region32: #{tpu_custom_call.1} parent=23 // pred_fallthru
          _
      $region24: #{tpu_custom_call.1} parent=5 // pred_fallthru
        _
      %p229 = scmp.le.s32.totalorder 1, %s19
      %p230 = scmp.lt.s32.totalorder %s19, 3
      %p231 = pnand %p229, %p230
      %p232 = pneg %p231
      // Predicated region
      $region33: #{tpu_custom_call.1} parent=5 // pred_check
        _
      $region34: #{tpu_custom_call.1} parent=5 // pred_check_branch
        %234 = sbr.rel (%p231) target = $region36
      $region35: #{tpu_custom_call.1} parent=5 // pred_region
        %s235 = ssub.s32 %s19, 1
        %s236 = sand.u32 %s46, 1
        %s237 = scalar_lea.sflag [#allocation5], %s236
        %s238 = sand.u32 %s46, 1
        %s239 = smul.addr %s238, 8
        %s240 = scalar_lea.vmem [#allocation4], %s239
        // Predicated region
        $region37: #{tpu_custom_call.1} parent=35 // pred_check
          %p241 = pneg %p59
        $region38: #{tpu_custom_call.1} parent=35 // pred_check_branch
          %243 = sbr.rel (%p241) target = $region40
        $region39: #{tpu_custom_call.1} parent=35 // pred_region
          %245 = dma.done %s237, 128
        $region40: #{tpu_custom_call.1} parent=35 // pred_fallthru
          _
        %s246 = sand.u32 %s24, 1
        %s247 = scalar_lea.sflag [#allocation8], %s246
        %s248 = sand.u32 %s74, 1
        %s249 = scalar_lea.vmem [#allocation7], %s248
        // Predicated region
        $region41: #{tpu_custom_call.1} parent=35 // pred_check
          %p250 = pneg %p87
        $region42: #{tpu_custom_call.1} parent=35 // pred_check_branch
          %252 = sbr.rel (%p250) target = $region44
        $region43: #{tpu_custom_call.1} parent=35 // pred_region
          %254 = dma.done %s247, 16
        $region44: #{tpu_custom_call.1} parent=35 // pred_fallthru
          _
        // Predicated region
        $region45: #{tpu_custom_call.1} parent=35 // pred_check
          %p255 = pneg %p108
        $region46: #{tpu_custom_call.1} parent=35 // pred_check_branch
          %257 = sbr.rel (%p255) target = $region48
        $region47: #{tpu_custom_call.1} parent=35 // pred_region
          %259 = dma.done [#allocation8], 512
        $region48: #{tpu_custom_call.1} parent=35 // pred_fallthru
          _
        %s260 = sand.u32 %s46, 1
        %s261 = scalar_lea.sflag [#allocation5], %s260
        %s262 = sand.u32 %s46, 1
        %s263 = smul.addr %s262, 8
        %s264 = scalar_lea.vmem [#allocation4], %s263
        %p265 = pneg %p59
        %p266 = pneg %p56
        %s267 = sand.u32 %s24, 1
        %s268 = scalar_lea.sflag [#allocation8], %s267
        %s269 = sand.u32 %s74, 1
        %s270 = scalar_lea.vmem [#allocation7], %s269
        %p271 = pneg %p87
        %p272 = pneg %p84
        %p273 = pneg %p108
        %p274 = pneg %p105
        %p275 = pneg %p129
        %p276 = pneg %p126
        %p277 = pneg %p155
        %p278 = pneg %p152
        %s279 = sand.u32 %s142, 1
        %s280 = scalar_lea.sflag [#allocation6], %s279
        %s281 = sand.u32 %s142, 1
        %s282 = scalar_lea.vmem [#allocation10], %s281
        %p283 = scmp.eq.s32.totalorder %s29, 0
        // Predicated region
        $region49: #{tpu_custom_call.1} parent=35 // pred_check
          %p284 = pneg %p283
        $region50: #{tpu_custom_call.1} parent=35 // pred_check_branch
          %286 = sbr.rel (%p284) target = $region52
        $region51: #{tpu_custom_call.1} parent=35 // pred_region
          %vm287 = vcmask 253952
          %288 = vst.msk [vmem:[#allocation2] sm:$0x1] %vm287, 0.0
          %vm289 = vcmask 0
          %290 = vst.msk [vmem:[#allocation3] sm:$0x1] %vm289, 0.0
        $region52: #{tpu_custom_call.1} parent=35 // pred_fallthru
          _
        %v291 = vld [vmem:[%s240] sm:$0xff]
        %v292 = vld [vmem:[%s249] sm:$0x1]
        %v293 = vld [vmem:[#allocation2] sm:$0x1]
        %vm294 = vcmask 64512
        %v296 = vsel %vm294, %v292, 0
        %298 = vmatpush.msra.mxu0 0.0
        %299 = vmatpush.msra.mxu0 0.0
        %300 = vmatpush.msra.mxu0 0.0
        %301 = vmatpush.msra.mxu0 0.0
        %302 = vmatpush.msra.mxu0 0.0
        %303 = vmatpush.msra.mxu0 0.0
        %304 = vmatpush.msra.mxu0 0.0
        %305 = vmatpush.msra.mxu0 0.0
        %306 = vmatpush.msra.mxu0 0.0
        %307 = vmatpush.msra.mxu0 0.0
        %308 = vmatpush.msra.mxu0 0.0
        %309 = vmatpush.msra.mxu0 0.0
        %310 = vmatpush.msra.mxu0 0.0
        %311 = vmatpush.msra.mxu0 0.0
        %312 = vmatpush.msra.mxu0 0.0
        %313 = vmatpush.msra.mxu0 %v291
        %314 = vmatmul.f32.gmra.mxu0 %v296
        %v315 = vpop.f32.mrf.mxu0
        %v316 = vadd.f32 0.0, %v315
        %317 = vdwg.mxu0
        %v318 = vadd.f32 %v293, %v316
        %vm319 = vcmask 253952
        %320 = vst.msk [vmem:[#allocation2] sm:$0x1] %vm319, %v318
        %v321 = vld [vmem:[#allocation3] sm:$0x1]
        %vm322 = vcmask 57344
        %v323 = vsel %vm322, %v292, 0.0
        %324 = vadd.xlane.f32.xlu0 %v323
        %v325 = vpop.xlane.xlu0 %324
        %v326 = vadd.f32 %v321, %v325
        %vm327 = vcmask 0
        %328 = vst.msk [vmem:[#allocation3] sm:$0x1] %vm327, %v326
        // Predicated region
        $region53: #{tpu_custom_call.1} parent=35 // pred_check
          %p329 = pneg %p283
        $region54: #{tpu_custom_call.1} parent=35 // pred_check_branch
          %331 = sbr.rel (%p329) target = $region56
        $region55: #{tpu_custom_call.1} parent=35 // pred_region
          %v332 = vld [vmem:[#allocation3] sm:$0x1]
          %v333 = vrcp.pop %v332
          %v334 = vmul.f32 %v332, %v333
          %v335 = vsub.f32 1.0, %v334
          %v336 = vmul.f32 %v333, %v335
          %v337 = vadd.f32 %v333, %v336
          %vm338 = vweird.f32 %v332
          %vm339 = vweird.f32 %v333
          %vm340 = vmor %vm338, %vm339
          %v341 = vsel %vm340, %v333, %v337
          %v342 = vand.u32 2147483647, %v332
          %vm343 = vcmp.eq.f32.partialorder %v342, 8.507059e+37
          %v344 = vand.u32 %v332, 2147483648
          %v345 = vor.u32 1.1754944e-38, %v344
          %v346 = vsel %vm343, %v345, %v341
          %v347 = vld [vmem:[#allocation2] sm:$0x1]
          %349 = vset.pattern.permute.xlu0 0
          %350 = vperm.xlu0 %349, %v346
          %v351 = vpop.permute.xlu0 %350
          %v353 = vperm.slane %v351, 0
          %v354 = vmul.f32 %v347, %v353
          %v355 = vld [vmem:[#allocation9] sm:$0xff]
          %v356 = vld [vmem:[#allocation9 + $0x8] sm:$0xff]
          %v357 = vld [vmem:[#allocation9 + $0x10] sm:$0xff]
          %v358 = vld [vmem:[#allocation9 + $0x18] sm:$0xff]
          %v359 = vld [vmem:[%s3] sm:$0x1]
          %vm360 = vcmask 261120
          %v362 = vsel %vm360, %v354, 0
          %364 = vmatpush.msra.mxu0 0.0
          %365 = vmatpush.msra.mxu0 0.0
          %366 = vmatpush.msra.mxu0 0.0
          %367 = vmatpush.msra.mxu0 0.0
          %368 = vmatpush.msra.mxu0 0.0
          %369 = vmatpush.msra.mxu0 0.0
          %370 = vmatpush.msra.mxu0 0.0
          %371 = vmatpush.msra.mxu0 0.0
          %372 = vmatpush.msra.mxu0 0.0
          %373 = vmatpush.msra.mxu0 0.0
          %374 = vmatpush.msra.mxu0 0.0
          %375 = vmatpush.msra.mxu0 0.0
          %376 = vmatpush.msra.mxu0 %v358
          %377 = vmatpush.msra.mxu0 %v357
          %378 = vmatpush.msra.mxu0 %v356
          %379 = vmatpush.msra.mxu0 %v355
          %380 = vmatmul.f32.gmra.mxu0 %v362
          %v381 = vpop.f32.mrf.mxu0
          %v382 = vadd.f32 %v359, %v381
          %383 = vdwg.mxu0
          %384 = vst [vmem:[%s282] sm:$0x1] %v382
        $region56: #{tpu_custom_call.1} parent=35 // pred_fallthru
          _
        %s385 = sand.u32 %s142, 1
        %s386 = scalar_lea.sflag [#allocation6], %s385
        %s387 = sand.u32 %s142, 1
        %s388 = scalar_lea.vmem [#allocation10], %s387
        // Predicated region
        $region57: #{tpu_custom_call.1} parent=35 // pred_check
          %p389 = pneg %p152
        $region58: #{tpu_custom_call.1} parent=35 // pred_check_branch
          %391 = sbr.rel (%p389) target = $region60
        $region59: #{tpu_custom_call.1} parent=35 // pred_region
          %393 = vsyncadd %s386, 0
          %s394 = scalar_lea.hbm %s4, %s28
          %s396 = sshll.u32 %s388, 4
          %s397 = int_to_ptr.vmem [resolvable:$true] %s396
          %s398 = sshll.u32 %s394, 4
          %s399 = int_to_ptr.hbm [resolvable:$true] %s398
          %401 = dma.vmem_to_hbm [thread:$0]  %s397, 16, %s399, %s386
        $region60: #{tpu_custom_call.1} parent=35 // pred_fallthru
          _
      $region36: #{tpu_custom_call.1} parent=5 // pred_fallthru
        _
      %p402 = scmp.le.s32.totalorder 2, %s19
      // Predicated region
      $region61: #{tpu_custom_call.1} parent=5 // pred_check
        %p403 = pneg %p402
      $region62: #{tpu_custom_call.1} parent=5 // pred_check_branch
        %405 = sbr.rel (%p403) target = $region64
      $region63: #{tpu_custom_call.1} parent=5 // pred_region
        %s406 = ssub.s32 %s19, 2
        // Predicated region
        $region65: #{tpu_custom_call.1} parent=63 // pred_check
          %p407 = pneg %p158
        $region66: #{tpu_custom_call.1} parent=63 // pred_check_branch
          %409 = sbr.rel (%p407) target = $region68
        $region67: #{tpu_custom_call.1} parent=63 // pred_region
          %s410 = sand.u32 %s143, 1
          %s411 = scalar_lea.sflag [#allocation6], %s410
          %s412 = sand.u32 %s143, 1
          %s413 = scalar_lea.vmem [#allocation10], %s412
          %415 = dma.done %s411, 16
        $region68: #{tpu_custom_call.1} parent=63 // pred_fallthru
          _
      $region64: #{tpu_custom_call.1} parent=5 // pred_fallthru
        _
    $region6: #{tpu_custom_call.1} parent=1 // loop_footer
      %s23 = sadd.s32 1, %s19
    $region7: #{tpu_custom_call.1} parent=1 // loop_footer_branch
      %18 = sbr.rel target = $region3
    $region8: #{tpu_custom_call.1} parent=1 // loop_exit
      _
    %416 = vsyncpa [#allocation5], 1
    %s417 = scalar_lea.sflag [#allocation5], 1
    %418 = vsyncpa %s417, 1
    %419 = vsyncpa [#allocation8], 1
    %s420 = scalar_lea.sflag [#allocation8], 1
    %421 = vsyncpa %s420, 1
    %422 = vsyncpa [#allocation6], 1
    %s423 = scalar_lea.sflag [#allocation6], 1
    %424 = vsyncpa %s423, 1

</llo_original>
